<compile_context>
chip_gen: v7x
topology: tpu7x:2x2x1
jax: 0.10.0
libtpu: 0.0.40
codegen_flags: <defaults>
</compile_context>

<pallas_src>
import math

import jax
import jax.numpy as jnp
from jax.experimental import pallas as pl
from jax.experimental.pallas import tpu as pltpu


def _round_up(x, m):
    return ((x + m - 1) // m) * m


def _vmem_capacity_bytes():
    """Physical VMEM per TensorCore; conservative 64 MiB (v7x) fallback."""
    try:
        info = pltpu.get_tpu_info()
        cap = getattr(info, "vmem_capacity_bytes", None)
        if cap:
            return int(cap)
    except Exception:
        pass
    return 64 * 1024 * 1024


def _tile_footprint_bytes(tm, th, Din, Dout, in_isz, out_isz):
    # Double-buffered pipelined inputs/outputs + single f32 accumulator scratch.
    return (2 * tm * Din * in_isz        # x row tile
            + 2 * Din * th * in_isz      # w1_t hidden chunk
            + 2 * th * Dout * in_isz     # w2_t hidden chunk
            + 2 * tm * Dout * out_isz    # output row tile
            + tm * Dout * 4)             # f32 accumulator


def _pick_tiles(M, Din, Dh, Dout, in_isz, out_isz, vmem_cap):
    """Pick (tm, th): maximize row-tile size (weight re-stream amortization) while
    keeping th large enough to amortize the accumulator RMW, within ~70% of VMEM."""
    budget = int(vmem_cap * 0.70)
    th_cands = [c for c in (1024, 512, 256, 128) if Dh % c == 0] or [Dh]
    tm_cands = [t for t in (1024, 768, 512, 384, 256, 192, 128, 64, 32, 16, 8)
                if t <= M] or [max(M, 1)]

    best_key, best = None, None
    for tm in tm_cands:
        for th in th_cands:
            if _tile_footprint_bytes(tm, th, Din, Dout, in_isz, out_isz) > budget:
                continue
            # tm drives HBM arithmetic intensity; th's benefit saturates ~512.
            key = (tm * min(th, 512), tm, th)
            if best_key is None or key > best_key:
                best_key, best = key, (tm, th)
    if best is None:
        best = (tm_cands[-1], th_cands[-1])
    return best


def _mlp_kernel(x_ref, w1_ref, w2_ref, o_ref, acc_ref):
    # x_ref:   (tm, Din)        row tile of the flattened input
    # w1_ref:  (Din, th)        hidden chunk of pre-transposed Linear-1 weight
    # w2_ref:  (th, Dout)       hidden chunk of pre-transposed Linear-2 weight
    # o_ref:   (tm, Dout)       output row tile (resident across the hidden axis)
    # acc_ref: (tm, Dout) f32   accumulator scratch
    j = pl.program_id(1)

    # h = relu(x @ w1_t) for this hidden chunk: (tm, Din) @ (Din, th) -> (tm, th).
    h = jnp.dot(x_ref[...], w1_ref[...], preferred_element_type=jnp.float32)
    # Cast before the ReLU: on bf16 the max runs on packed vregs (identical result;
    # dropout p=0 -> identity).
    h = jnp.maximum(h.astype(w2_ref.dtype), 0.0)

    # Chunk contribution: (tm, th) @ (th, Dout) -> (tm, Dout), f32 accumulate.
    contrib = jnp.dot(h, w2_ref[...], preferred_element_type=jnp.float32)

    @pl.when(j == 0)
    def _init():               # folded init: no zero-fill + read-modify-write
        acc_ref[...] = contrib

    @pl.when(j != 0)
    def _accum():
        acc_ref[...] += contrib

    @pl.when(j == pl.num_programs(1) - 1)
    def _finalize():
        o_ref[...] = acc_ref[...].astype(o_ref.dtype)


def prepare_mlp_params(w1, w2, *, hidden_multiple=128):
    """One-time conversion of PyTorch-layout weights to kernel layout.

    w1 : (Dh, Din)   nn.Linear(mlp_dim, mlp_dim).weight     (out_features, in_features)
    w2 : (Dout, Dh)  nn.Linear(mlp_dim, out_dim).weight
    Returns (w1_t, w2_t) with shapes (Din, Dhp) and (Dhp, Dout); the hidden dim is
    zero-padded to a multiple of `hidden_multiple` (exact: relu(0)=0, zero w2 rows).
    Do this once at parameter-load time, NOT per forward call.
    """
    Dh, Din = w1.shape
    Dout, Dh2 = w2.shape
    assert Dh2 == Dh, (w1.shape, w2.shape)
    Dhp = _round_up(Dh, hidden_multiple)
    w1_t = jnp.swapaxes(w1, 0, 1)   # (Din, Dh)
    w2_t = jnp.swapaxes(w2, 0, 1)   # (Dh, Dout)
    if Dhp != Dh:
        w1_t = jnp.pad(w1_t, ((0, 0), (0, Dhp - Dh)))
        w2_t = jnp.pad(w2_t, ((0, Dhp - Dh), (0, 0)))
    return w1_t, w2_t


def transformer_mlp_block(x, w1_t, w2_t, *, tm=None, th=None):
    """Forward pass of TransformerMlpBlock (dropout_rate = 0 / eval).

    x    : (..., Din)    activations (Din == mlp_dim for this module)
    w1_t : (Din, Dh)     pre-transposed Linear-1 weight (see prepare_mlp_params)
    w2_t : (Dh, Dout)    pre-transposed Linear-2 weight
    returns (..., Dout)
    """
    Din, Dh = w1_t.shape
    Dh2, Dout = w2_t.shape
    assert Dh2 == Dh, (w1_t.shape, w2_t.shape)
    assert x.shape[-1] == Din, (x.shape, w1_t.shape)

    lead_shape = x.shape[:-1]
    xm = x.reshape(-1, Din)
    M = xm.shape[0]

    in_isz = jnp.dtype(x.dtype).itemsize
    out_isz = in_isz
    vmem_cap = _vmem_capacity_bytes()

    tm_auto, th_auto = _pick_tiles(M, Din, Dh, Dout, in_isz, out_isz, vmem_cap)
    tm = tm_auto if tm is None else tm
    th = th_auto if th is None else th

    # Clamp to full extents for small problems (block == full dim is always legal).
    tm_eff = M if M <= tm else tm
    th_eff = Dh if Dh <= th else th
    if Dh % th_eff != 0:
        # No per-call weight padding: fall back to a 128-multiple divisor (prepare_
        # mlp_params pads Dh to a multiple of 128), else take the full hidden dim.
        for c in (1024, 512, 384, 256, 128):
            if c <= th_eff and Dh % c == 0:
                th_eff = c
                break
        else:
            th_eff = Dh

    # Zero-pad M to a row-tile multiple (cheap; exact since padded rows are dropped).
    Mp = _round_up(M, tm_eff)
    if Mp != M:
        xm = jnp.pad(xm, ((0, Mp - M), (0, 0)))

    grid = (Mp // tm_eff, Dh // th_eff)   # (M tiles [parallel], hidden chunks [reduction])

    # VMEM limit from the actual tile footprint (not a hard-coded constant).
    fp = _tile_footprint_bytes(tm_eff, th_eff, Din, Dout, in_isz, out_isz)
    vmem_limit = min(int(vmem_cap * 0.9), max(32 * 1024 * 1024, fp + 16 * 1024 * 1024))

    # True HBM traffic: weights are re-streamed once per M row tile.
    bytes_accessed = (xm.size * in_isz
                      + grid[0] * (w1_t.size + w2_t.size) * jnp.dtype(w1_t.dtype).itemsize
                      + Mp * Dout * out_isz)
    cost = pl.CostEstimate(flops=2 * Mp * Dh * (Din + Dout),
                           transcendentals=0,
                           bytes_accessed=bytes_accessed)

    out = pl.pallas_call(
        _mlp_kernel,
        out_shape=jax.ShapeDtypeStruct((Mp, Dout), x.dtype),
        grid_spec=pltpu.PrefetchScalarGridSpec(
            num_scalar_prefetch=0,
            grid=grid,
            in_specs=[
                # x row tile: block index constant across j -> fetched once per i.
                pl.BlockSpec((tm_eff, Din), lambda i, j: (i, 0)),
                # w1_t hidden chunk (NN form: contract Din with x's minor dim).
                pl.BlockSpec((Din, th_eff), lambda i, j: (0, j)),
                # w2_t hidden chunk.
                pl.BlockSpec((th_eff, Dout), lambda i, j: (j, 0)),
            ],
            out_specs=pl.BlockSpec((tm_eff, Dout), lambda i, j: (i, 0)),
            scratch_shapes=[pltpu.VMEM((tm_eff, Dout), jnp.float32)],
        ),
        compiler_params=pltpu.CompilerParams(
            dimension_semantics=("parallel", "arbitrary"),
            vmem_limit_bytes=vmem_limit,
        ),
        cost_estimate=cost,
    )(xm, w1_t, w2_t)

    if Mp != M:
        out = out[:M]
    return out.reshape(*lead_shape, Dout)


def _xavier_uniform(key, out_features, in_features, dtype=jnp.float32):
    bound = math.sqrt(6.0 / (in_features + out_features))
    return jax.random.uniform(key, (out_features, in_features),
                              minval=-bound, maxval=bound, dtype=dtype)


def _ref(x, w1, w2):
    # Pure-JAX reference of the PyTorch forward (dropout p=0 is identity),
    # using the original PyTorch (out_features, in_features) weight layout.
    xf = x.astype(jnp.float32)
    return jnp.maximum(xf @ w1.astype(jnp.float32).T, 0.0) @ w2.astype(jnp.float32).T


if __name__ == "__main__":
    key = jax.random.PRNGKey(0)
    k_x, k_w1, k_w2, k_x2, k_w1b, k_w2b = jax.random.split(key, 6)

    # --- Test 1: small shapes from the module spec (single grid step) -------------
    batch, seq, mlp_dim = 2, 8, 32
    out_dim = mlp_dim  # out_dim=None in the module -> mlp_dim

    x = jax.random.normal(k_x, (batch, seq, mlp_dim), dtype=jnp.float32)
    w1 = _xavier_uniform(k_w1, mlp_dim, mlp_dim)      # Linear(mlp_dim, mlp_dim, bias=False)
    w2 = _xavier_uniform(k_w2, out_dim, mlp_dim)      # Linear(mlp_dim, out_dim, bias=False)
    w1_t, w2_t = prepare_mlp_params(w1, w2)           # one-time weight prep

    y = jax.block_until_ready(transformer_mlp_block(x, w1_t, w2_t))
    y_ref = _ref(x, w1, w2)
    assert y.shape == (batch, seq, out_dim), y.shape
    assert jnp.allclose(y, y_ref, atol=1e-4, rtol=1e-4), "f32 small-case mismatch"

    # --- Test 2: exercises M-tiling, hidden-chunk accumulation, and padding -------
    b2, s2, d2, o2 = 2, 60, 200, 160      # M=120 -> pad 128; Dh=200 -> prep-pad 256
    x2 = jax.random.normal(k_x2, (b2, s2, d2), dtype=jnp.float32)
    w1b = _xavier_uniform(k_w1b, d2, d2)
    w2b = _xavier_uniform(k_w2b, o2, d2)
    w1b_t, w2b_t = prepare_mlp_params(w1b, w2b)

    y2 = jax.block_until_ready(transformer_mlp_block(x2, w1b_t, w2b_t, tm=64, th=128))
    y2_ref = _ref(x2, w1b, w2b)
    assert y2.shape == (b2, s2, o2), y2.shape
    # Tolerance covers MXU-vs-XLA f32 matmul precision differences; structural errors
    # (missed hidden chunk / bad padding) would be O(1), far outside this band.
    assert jnp.allclose(y2, y2_ref, atol=2e-2, rtol=2e-2), "tiled f32 case mismatch"

    # --- Test 3: bf16 inputs/weights (native MXU rate path), f32 accumulate -------
    # Note: h is rounded f32->bf16 before the second matmul (intended bf16-rate path);
    # the reference below keeps bf16 weights but computes in f32 throughout.
    xb = x.astype(jnp.bfloat16)
    w1c_t, w2c_t = prepare_mlp_params(w1.astype(jnp.bfloat16), w2.astype(jnp.bfloat16))
    y3 = jax.block_until_ready(transformer_mlp_block(xb, w1c_t, w2c_t))
    y3_ref = _ref(xb, w1.astype(jnp.bfloat16), w2.astype(jnp.bfloat16))
    assert jnp.allclose(y3.astype(jnp.float32), y3_ref, atol=3e-2, rtol=3e-2), \
        "bf16 case mismatch"

    print("KERNEL_OK")
</pallas_src>

<mosaic_0001>
module attributes {stable_mosaic.version = 11 : i64} {
  func.func @_mlp_kernel(%arg0: i32, %arg1: i32, %arg2: memref<16x32xf32, #tpu.memory_space<vmem>>, %arg3: memref<32x128xf32, #tpu.memory_space<vmem>>, %arg4: memref<128x32xf32, #tpu.memory_space<vmem>>, %arg5: memref<16x32xf32, #tpu.memory_space<vmem>>, %arg6: memref<16x32xf32, #tpu.memory_space<vmem>>) attributes {dimension_semantics = [#tpu.dimension_semantics<parallel>, #tpu.dimension_semantics<arbitrary>], iteration_bounds = array<i64: 1, 1>, scalar_prefetch = 0 : i64, scratch_operands = 1 : i64, tpu.core_type = #tpu.core_type<tc>, window_params = [{transform_indices = @transform_0, window_bounds = array<i64: 16, 32>}, {transform_indices = @transform_1, window_bounds = array<i64: 32, 128>}, {transform_indices = @transform_2, window_bounds = array<i64: 128, 32>}, {transform_indices = @transform_3, window_bounds = array<i64: 16, 32>}]} {
    %c0 = arith.constant 0 : index
    %c0_0 = arith.constant 0 : index
    %0 = vector.load %arg2[%c0, %c0_0] : memref<16x32xf32, #tpu.memory_space<vmem>>, vector<16x32xf32>
    %c0_1 = arith.constant 0 : index
    %c0_2 = arith.constant 0 : index
    %1 = vector.load %arg3[%c0_1, %c0_2] : memref<32x128xf32, #tpu.memory_space<vmem>>, vector<32x128xf32>
    %cst = arith.constant dense<0.000000e+00> : vector<16x128xf32>
    %2 = tpu.matmul %0, %1, %cst {dimension_numbers = #tpu.dot_dimension_numbers<[1], [0], [0], [1], [0, 0, 1, 1], [], []>} : vector<16x32xf32>, vector<32x128xf32>, vector<16x128xf32> -> vector<16x128xf32>
    %cst_3 = arith.constant 0.000000e+00 : f32
    %3 = vector.broadcast %cst_3 : f32 to vector<16x128xf32>
    %4 = arith.maximumf %2, %3 : vector<16x128xf32>
    %c0_4 = arith.constant 0 : index
    %c0_5 = arith.constant 0 : index
    %5 = vector.load %arg4[%c0_4, %c0_5] : memref<128x32xf32, #tpu.memory_space<vmem>>, vector<128x32xf32>
    %cst_6 = arith.constant dense<0.000000e+00> : vector<16x32xf32>
    %6 = tpu.matmul %4, %5, %cst_6 {dimension_numbers = #tpu.dot_dimension_numbers<[1], [0], [0], [1], [0, 0, 1, 1], [], []>} : vector<16x128xf32>, vector<128x32xf32>, vector<16x32xf32> -> vector<16x32xf32>
    %c0_i32 = arith.constant 0 : i32
    %7 = arith.cmpi eq, %arg1, %c0_i32 : i32
    %8 = arith.extui %7 : i1 to i32
    %c0_i32_7 = arith.constant 0 : i32
    %9 = arith.cmpi ne, %8, %c0_i32_7 : i32
    scf.if %9 {
      %c0_12 = arith.constant 0 : index
      %c0_13 = arith.constant 0 : index
      %16 = vector.load %arg6[%c0_12, %c0_13] : memref<16x32xf32, #tpu.memory_space<vmem>>, vector<16x32xf32>
      tpu.vector_store %arg6[%c0_12, %c0_13], %6 {strides = array<i32>} : memref<16x32xf32, #tpu.memory_space<vmem>>, vector<16x32xf32>,
    } else {
    }
    %c0_i32_8 = arith.constant 0 : i32
    %10 = arith.cmpi ne, %arg1, %c0_i32_8 : i32
    %11 = arith.extui %10 : i1 to i32
    %c0_i32_9 = arith.constant 0 : i32
    %12 = arith.cmpi ne, %11, %c0_i32_9 : i32
    scf.if %12 {
      %c0_12 = arith.constant 0 : index
      %c0_13 = arith.constant 0 : index
      %16 = vector.load %arg6[%c0_12, %c0_13] : memref<16x32xf32, #tpu.memory_space<vmem>>, vector<16x32xf32>
      %17 = arith.addf %16, %6 : vector<16x32xf32>
      %c0_14 = arith.constant 0 : index
      %c0_15 = arith.constant 0 : index
      %18 = vector.load %arg6[%c0_14, %c0_15] : memref<16x32xf32, #tpu.memory_space<vmem>>, vector<16x32xf32>
      tpu.vector_store %arg6[%c0_14, %c0_15], %17 {strides = array<i32>} : memref<16x32xf32, #tpu.memory_space<vmem>>, vector<16x32xf32>,
    } else {
    }
    %c0_i32_10 = arith.constant 0 : i32
    %13 = arith.cmpi eq, %arg1, %c0_i32_10 : i32
    %14 = arith.extui %13 : i1 to i32
    %c0_i32_11 = arith.constant 0 : i32
    %15 = arith.cmpi ne, %14, %c0_i32_11 : i32
    scf.if %15 {
      %c0_12 = arith.constant 0 : index
      %c0_13 = arith.constant 0 : index
      %16 = vector.load %arg6[%c0_12, %c0_13] : memref<16x32xf32, #tpu.memory_space<vmem>>, vector<16x32xf32>
      %c0_14 = arith.constant 0 : index
      %c0_15 = arith.constant 0 : index
      %17 = vector.load %arg5[%c0_14, %c0_15] : memref<16x32xf32, #tpu.memory_space<vmem>>, vector<16x32xf32>
      tpu.vector_store %arg5[%c0_14, %c0_15], %16 {strides = array<i32>} : memref<16x32xf32, #tpu.memory_space<vmem>>, vector<16x32xf32>,
    } else {
    }
    return
  }
  func.func @transform_0(%arg0: i32, %arg1: i32) -> (i32, i32) {
    %c0_i32 = arith.constant 0 : i32
    %c0_i32_0 = arith.constant 0 : i32
    return %arg0, %c0_i32 : i32, i32
  }
  func.func @transform_1(%arg0: i32, %arg1: i32) -> (i32, i32) {
    %c0_i32 = arith.constant 0 : i32
    %c0_i32_0 = arith.constant 0 : i32
    return %c0_i32, %arg1 : i32, i32
  }
  func.func @transform_2(%arg0: i32, %arg1: i32) -> (i32, i32) {
    %c0_i32 = arith.constant 0 : i32
    %c0_i32_0 = arith.constant 0 : i32
    return %arg1, %c0_i32 : i32, i32
  }
  func.func @transform_3(%arg0: i32, %arg1: i32) -> (i32, i32) {
    %c0_i32 = arith.constant 0 : i32
    %c0_i32_0 = arith.constant 0 : i32
    return %arg0, %c0_i32 : i32, i32
  }
}

</mosaic_0001>

<llo_original>
// kernel: tpu_custom_call.1
$region0: #{tpu_custom_call.1}
  #allocation0 [shape = 'u32[]', space=smem, size = 0x4, offset = 0x4, fixed_abs, tag = 'smem constant byte address 0x4 - core index']
  #allocation1 [shape = 'u32[144,128]{1,0:T(1,128)}', space=vmem, size = 0x12000, scoped, tag = 'internal scratch']
  #allocation2 [shape = 'f32[16,32]{1,0:T(8,128)}', space=vmem, size = 0x2000, scoped, tag = 'scratch operand']
  %s0 = inlined_call_operand.vmem [shape: f32[16,32], index: 0, kind: input, shape index: {}]
  %s1 = inlined_call_operand.vmem [shape: f32[32,128], index: 1, kind: input, shape index: {}]
  %s2 = inlined_call_operand.vmem [shape: f32[128,32], index: 2, kind: input, shape index: {}]
  %s3 = inlined_call_operand.hbm [shape: f32[16,32], index: 3, kind: output, shape index: {}]
  %s4 = sld [smem:[#allocation0]]
  $region34: #{tpu_custom_call.1} parent=0
    _
  %s6 = ssub.s32 1, %s4
  %s7 = scalar_select 0, %s6, %s4
  $region1: #{tpu_custom_call.1} parent=0
    #allocation3 [shape = 'u8[8192]{0}', space=vmem, size = 0x2000, scoped, tag = 'output window, operand 0, single buffered']
    #allocation4 [shape = 's32[1]{0}', space=sflag, size = 0x4, scoped, tag = 'scoped memory for tpu_custom_call.1']
    %8 = vsyncpa [#allocation4], 0
    // Predicated region
    $region2: #{tpu_custom_call.1} parent=1 // pred_check
      _
    $region3: #{tpu_custom_call.1} parent=1 // pred_check_branch
      %10 = sbr.rel (0) target = $region5
    $region4: #{tpu_custom_call.1} parent=1 // pred_region
      _
    $region5: #{tpu_custom_call.1} parent=1 // pred_fallthru
      _
    // Predicated region
    $region6: #{tpu_custom_call.1} parent=1 // pred_check
      _
    $region7: #{tpu_custom_call.1} parent=1 // pred_check_branch
      %12 = sbr.rel (0) target = $region9
    $region8: #{tpu_custom_call.1} parent=1 // pred_region
      _
    $region9: #{tpu_custom_call.1} parent=1 // pred_fallthru
      _
    // Predicated region
    $region10: #{tpu_custom_call.1} parent=1 // pred_check
      _
    $region11: #{tpu_custom_call.1} parent=1 // pred_check_branch
      %14 = sbr.rel (0) target = $region13
    $region12: #{tpu_custom_call.1} parent=1 // pred_region
      _
    $region13: #{tpu_custom_call.1} parent=1 // pred_fallthru
      _
    %v15 = vld [vmem:[%s0] sm:$0xff]
    %v16 = vld [vmem:[%s0 + $0x8] sm:$0xff]
    %v17 = vld [vmem:[%s1] sm:$0xff]
    %v18 = vld [vmem:[%s1 + $0x8] sm:$0xff]
    %v19 = vld [vmem:[%s1 + $0x10] sm:$0xff]
    %v20 = vld [vmem:[%s1 + $0x18] sm:$0xff]
    %vm21 = vcmask 261120
    %v23 = vsel %vm21, %v15, 0
    %v26 = vsel %vm21, %v16, 0
    %28 = vmatprep.subr.mxu0 0.0
    %29 = vmatpush1.msra.mxu0 %v17
    %30 = vmatprep.subr.mxu0 0.0
    %31 = vmatpush1.msra.mxu0 %v18
    %32 = vmatprep.subr.mxu0 0.0
    %33 = vmatpush1.msra.mxu0 %v19
    %34 = vmatprep.subr.mxu0 0.0
    %35 = vmatpush1.msra.mxu0 %v20
    %36 = vmatprep.subr.mxu0 0.0
    %37 = vmatpush1.msra.mxu0 0.0
    %38 = vmatprep.subr.mxu0 0.0
    %39 = vmatpush1.msra.mxu0 0.0
    %40 = vmatprep.subr.mxu0 0.0
    %41 = vmatpush1.msra.mxu0 0.0
    %42 = vmatprep.subr.mxu0 0.0
    %43 = vmatpush1.msra.mxu0 0.0
    %44 = vmatprep.subr.mxu0 0.0
    %45 = vmatpush1.msra.mxu0 0.0
    %46 = vmatprep.subr.mxu0 0.0
    %47 = vmatpush1.msra.mxu0 0.0
    %48 = vmatprep.subr.mxu0 0.0
    %49 = vmatpush1.msra.mxu0 0.0
    %50 = vmatprep.subr.mxu0 0.0
    %51 = vmatpush1.msra.mxu0 0.0
    %52 = vmatprep.subr.mxu0 0.0
    %53 = vmatpush1.msra.mxu0 0.0
    %54 = vmatprep.subr.mxu0 0.0
    %55 = vmatpush1.msra.mxu0 0.0
    %56 = vmatprep.subr.mxu0 0.0
    %57 = vmatpush1.msra.mxu0 0.0
    %58 = vmatprep.subr.mxu0 0.0
    %59 = vmatpush1.msra.mxu0 0.0
    %60 = vmatprep.subr.mxu0 0.0
    %61 = vmatpush1.msra.mxu0 0.0
    %62 = vmatprep.subr.mxu0 0.0
    %63 = vmatpush1.msra.mxu0 0.0
    %64 = vmatprep.subr.mxu0 0.0
    %65 = vmatpush1.msra.mxu0 0.0
    %66 = vmatprep.subr.mxu0 0.0
    %67 = vmatpush1.msra.mxu0 0.0
    %68 = vmatprep.subr.mxu0 0.0
    %69 = vmatpush1.msra.mxu0 0.0
    %70 = vmatprep.subr.mxu0 0.0
    %71 = vmatpush1.msra.mxu0 0.0
    %72 = vmatprep.subr.mxu0 0.0
    %73 = vmatpush1.msra.mxu0 0.0
    %74 = vmatprep.subr.mxu0 0.0
    %75 = vmatpush1.msra.mxu0 0.0
    %76 = vmatprep.subr.mxu0 0.0
    %77 = vmatpush1.msra.mxu0 0.0
    %78 = vmatprep.subr.mxu0 0.0
    %79 = vmatpush1.msra.mxu0 0.0
    %80 = vmatprep.subr.mxu0 0.0
    %81 = vmatpush1.msra.mxu0 0.0
    %82 = vmatprep.subr.mxu0 0.0
    %83 = vmatpush1.msra.mxu0 0.0
    %84 = vmatprep.subr.mxu0 0.0
    %85 = vmatpush1.msra.mxu0 0.0
    %86 = vmatprep.subr.mxu0 0.0
    %87 = vmatpush1.msra.mxu0 0.0
    %88 = vmatprep.subr.mxu0 0.0
    %89 = vmatpush1.msra.mxu0 0.0
    %90 = vmatprep.subr.mxu0 0.0
    %91 = vmatpush1.msra.mxu0 0.0
    %92 = vmatprep.mubr.f32.mxu0 0.0
    %93 = vmatmul.mubr.f32.gmra.mrb[0].mxu0 %v23
    %v94 = vpop.f32.mrb[0].mxu0
    %v95 = vadd.f32 0.0, %v94
    %v96 = vpop.f32.mrb[0].mxu0
    %97 = vmatprep.mubr.f32.mxu0 0.0
    %98 = vmatmul.mubr.f32.gmra.mrb[0].mxu0 %v26
    %v99 = vpop.f32.mrb[0].mxu0
    %v100 = vadd.f32 0.0, %v99
    %v101 = vpop.f32.mrb[0].mxu0
    %102 = vdwg.mxu0
    %v103 = vmax.f32 %v95, 0.0
    %v104 = vmax.f32 %v100, 0.0
    %v105 = vld [vmem:[%s2] sm:$0xff]
    %v106 = vld [vmem:[%s2 + $0x8] sm:$0xff]
    %v107 = vld [vmem:[%s2 + $0x10] sm:$0xff]
    %v108 = vld [vmem:[%s2 + $0x18] sm:$0xff]
    %v109 = vld [vmem:[%s2 + $0x20] sm:$0xff]
    %v110 = vld [vmem:[%s2 + $0x28] sm:$0xff]
    %v111 = vld [vmem:[%s2 + $0x30] sm:$0xff]
    %v112 = vld [vmem:[%s2 + $0x38] sm:$0xff]
    %v113 = vld [vmem:[%s2 + $0x40] sm:$0xff]
    %v114 = vld [vmem:[%s2 + $0x48] sm:$0xff]
    %v115 = vld [vmem:[%s2 + $0x50] sm:$0xff]
    %v116 = vld [vmem:[%s2 + $0x58] sm:$0xff]
    %v117 = vld [vmem:[%s2 + $0x60] sm:$0xff]
    %v118 = vld [vmem:[%s2 + $0x68] sm:$0xff]
    %v119 = vld [vmem:[%s2 + $0x70] sm:$0xff]
    %v120 = vld [vmem:[%s2 + $0x78] sm:$0xff]
    %121 = vmatprep.subr.mxu0 0.0
    %122 = vmatpush1.msra.mxu0 %v105
    %123 = vmatprep.subr.mxu0 0.0
    %124 = vmatpush1.msra.mxu0 %v106
    %125 = vmatprep.subr.mxu0 0.0
    %126 = vmatpush1.msra.mxu0 %v107
    %127 = vmatprep.subr.mxu0 0.0
    %128 = vmatpush1.msra.mxu0 %v108
    %129 = vmatprep.subr.mxu0 0.0
    %130 = vmatpush1.msra.mxu0 %v109
    %131 = vmatprep.subr.mxu0 0.0
    %132 = vmatpush1.msra.mxu0 %v110
    %133 = vmatprep.subr.mxu0 0.0
    %134 = vmatpush1.msra.mxu0 %v111
    %135 = vmatprep.subr.mxu0 0.0
    %136 = vmatpush1.msra.mxu0 %v112
    %137 = vmatprep.subr.mxu0 0.0
    %138 = vmatpush1.msra.mxu0 %v113
    %139 = vmatprep.subr.mxu0 0.0
    %140 = vmatpush1.msra.mxu0 %v114
    %141 = vmatprep.subr.mxu0 0.0
    %142 = vmatpush1.msra.mxu0 %v115
    %143 = vmatprep.subr.mxu0 0.0
    %144 = vmatpush1.msra.mxu0 %v116
    %145 = vmatprep.subr.mxu0 0.0
    %146 = vmatpush1.msra.mxu0 %v117
    %147 = vmatprep.subr.mxu0 0.0
    %148 = vmatpush1.msra.mxu0 %v118
    %149 = vmatprep.subr.mxu0 0.0
    %150 = vmatpush1.msra.mxu0 %v119
    %151 = vmatprep.subr.mxu0 0.0
    %152 = vmatpush1.msra.mxu0 %v120
    %153 = vmatprep.subr.mxu0 0.0
    %154 = vmatpush1.msra.mxu0 0.0
    %155 = vmatprep.subr.mxu0 0.0
    %156 = vmatpush1.msra.mxu0 0.0
    %157 = vmatprep.subr.mxu0 0.0
    %158 = vmatpush1.msra.mxu0 0.0
    %159 = vmatprep.subr.mxu0 0.0
    %160 = vmatpush1.msra.mxu0 0.0
    %161 = vmatprep.subr.mxu0 0.0
    %162 = vmatpush1.msra.mxu0 0.0
    %163 = vmatprep.subr.mxu0 0.0
    %164 = vmatpush1.msra.mxu0 0.0
    %165 = vmatprep.subr.mxu0 0.0
    %166 = vmatpush1.msra.mxu0 0.0
    %167 = vmatprep.subr.mxu0 0.0
    %168 = vmatpush1.msra.mxu0 0.0
    %169 = vmatprep.subr.mxu0 0.0
    %170 = vmatpush1.msra.mxu0 0.0
    %171 = vmatprep.subr.mxu0 0.0
    %172 = vmatpush1.msra.mxu0 0.0
    %173 = vmatprep.subr.mxu0 0.0
    %174 = vmatpush1.msra.mxu0 0.0
    %175 = vmatprep.subr.mxu0 0.0
    %176 = vmatpush1.msra.mxu0 0.0
    %177 = vmatprep.subr.mxu0 0.0
    %178 = vmatpush1.msra.mxu0 0.0
    %179 = vmatprep.subr.mxu0 0.0
    %180 = vmatpush1.msra.mxu0 0.0
    %181 = vmatprep.subr.mxu0 0.0
    %182 = vmatpush1.msra.mxu0 0.0
    %183 = vmatprep.subr.mxu0 0.0
    %184 = vmatpush1.msra.mxu0 0.0
    %185 = vmatprep.mubr.f32.mxu0 0.0
    %186 = vmatmul.mubr.f32.gmra.mrb[0].mxu0 %v103
    %v187 = vpop.f32.mrb[0].mxu0
    %v188 = vadd.f32 0.0, %v187
    %v189 = vpop.f32.mrb[0].mxu0
    %190 = vmatprep.mubr.f32.mxu0 0.0
    %191 = vmatmul.mubr.f32.gmra.mrb[0].mxu0 %v104
    %v192 = vpop.f32.mrb[0].mxu0
    %v193 = vadd.f32 0.0, %v192
    %v194 = vpop.f32.mrb[0].mxu0
    %195 = vdwg.mxu0
    %p196 = scmp.eq.s32.totalorder 0, 0
    // Predicated region
    $region14: #{tpu_custom_call.1} parent=1 // pred_check
      %p197 = pneg %p196
    $region15: #{tpu_custom_call.1} parent=1 // pred_check_branch
      %199 = sbr.rel (%p197) target = $region17
    $region16: #{tpu_custom_call.1} parent=1 // pred_region
      %200 = vst.msk [vmem:[#allocation2] sm:$0xff] %vm21, %v188
      %201 = vst.msk [vmem:[#allocation2 + $0x8] sm:$0xff] %vm21, %v193
    $region17: #{tpu_custom_call.1} parent=1 // pred_fallthru
      _
    %p202 = scmp.ne.s32.totalorder 0, 0
    // Predicated region
    $region18: #{tpu_custom_call.1} parent=1 // pred_check
      %p203 = pneg %p202
    $region19: #{tpu_custom_call.1} parent=1 // pred_check_branch
      %205 = sbr.rel (%p203) target = $region21
    $region20: #{tpu_custom_call.1} parent=1 // pred_region
      %v206 = vld [vmem:[#allocation2] sm:$0xff]
      %v207 = vld [vmem:[#allocation2 + $0x8] sm:$0xff]
      %v208 = vadd.f32 %v206, %v188
      %v209 = vadd.f32 %v207, %v193
      %210 = vst.msk [vmem:[#allocation2] sm:$0xff] %vm21, %v208
      %211 = vst.msk [vmem:[#allocation2 + $0x8] sm:$0xff] %vm21, %v209
    $region21: #{tpu_custom_call.1} parent=1 // pred_fallthru
      _
    // Predicated region
    $region22: #{tpu_custom_call.1} parent=1 // pred_check
      %p212 = pneg %p196
    $region23: #{tpu_custom_call.1} parent=1 // pred_check_branch
      %214 = sbr.rel (%p212) target = $region25
    $region24: #{tpu_custom_call.1} parent=1 // pred_region
      %v215 = vld [vmem:[#allocation2] sm:$0xff]
      %v216 = vld [vmem:[#allocation2 + $0x8] sm:$0xff]
      %217 = vst.msk [vmem:[#allocation3] sm:$0xff] %vm21, %v215
      %218 = vst.msk [vmem:[#allocation3 + $0x8] sm:$0xff] %vm21, %v216
    $region25: #{tpu_custom_call.1} parent=1 // pred_fallthru
      _
    // Predicated region
    $region26: #{tpu_custom_call.1} parent=1 // pred_check
      _
    $region27: #{tpu_custom_call.1} parent=1 // pred_check_branch
      %220 = sbr.rel (0) target = $region29
    $region28: #{tpu_custom_call.1} parent=1 // pred_region
      %s222 = ssub.s32 256, 256
      %223 = vsyncadd [#allocation4], %s222
      %s224 = sshll.u32 [#allocation3], 4
      %s225 = int_to_ptr.vmem [resolvable:$true] %s224
      %230 = dma.vmem_to_hbm [thread:$0]  %s225, 256, %s3, [#allocation4], 128, 128, 8
    $region29: #{tpu_custom_call.1} parent=1 // pred_fallthru
      _
    // Predicated region
    $region30: #{tpu_custom_call.1} parent=1 // pred_check
      _
    $region31: #{tpu_custom_call.1} parent=1 // pred_check_branch
      %232 = sbr.rel (0) target = $region33
    $region32: #{tpu_custom_call.1} parent=1 // pred_region
      %233 = dma.done [#allocation4], 256
    $region33: #{tpu_custom_call.1} parent=1 // pred_fallthru
      _
    %234 = vsyncpa [#allocation4], 1

</llo_original>
